<compile_context>
chip_gen: v7x
topology: tpu7x:2x2x1
jax: 0.10.0
libtpu: 0.0.40
codegen_flags: <defaults>
</compile_context>

<pallas_src>
import jax
import jax.numpy as jnp
from jax.experimental import pallas as pl
from jax.experimental.pallas import tpu as pltpu


def _lm_head_kernel(x_ref, w_ref, o_ref, acc_ref):
    """Computes one (tm, tn) logits tile; K-reduction runs along grid axis 2."""

    @pl.when(pl.program_id(2) == 0)
    def _init():
        acc_ref[...] = jnp.zeros_like(acc_ref)

    # x_tile: (tm, tk), w_tile: (tn, tk)  ->  contract the shared K (last)
    # dims, i.e. x @ W.T, accumulated in f32 on the MXU.
    acc_ref[...] += jax.lax.dot_general(
        x_ref[...], w_ref[...],
        dimension_numbers=(((1,), (1,)), ((), ())),
        preferred_element_type=jnp.float32)

    @pl.when(pl.program_id(2) == pl.num_programs(2) - 1)
    def _finalize():
        o_ref[...] = acc_ref[...].astype(o_ref.dtype)


def _round_up(a: int, b: int) -> int:
    return (a + b - 1) // b * b


def gpt2_lm_head(x, weight, bias=None, *, tm=None, tn=None, tk=None,
                 out_dtype=jnp.float32):
    """Pallas equivalent of GPT2LMHead.forward.

    x:      [B, S, H]  activations (any float dtype; bf16 recommended)
    weight: [V, H]     classifier / tied word-embedding weight
    bias:   [V] or None (module default is bias=False)
    returns [B, S, V]  logits in `out_dtype`
    """
    B, S, H = x.shape
    V, H2 = weight.shape
    assert H2 == H, "weight hidden dim mismatch"

    M = B * S
    # Tile sizes: MXU/layout friendly, shrink for tiny problems.
    tm = tm or min(256, _round_up(M, 8))
    tk = tk or min(512, _round_up(H, 128))
    tn = tn or min(512, _round_up(V, 128))

    Mp, Kp, Np = _round_up(M, tm), _round_up(H, tk), _round_up(V, tn)

    x2 = x.reshape(M, H)
    if (Mp, Kp) != (M, H):
        x2 = jnp.pad(x2, ((0, Mp - M), (0, Kp - H)))   # zero K-pad: no effect
    w = weight
    if (Np, Kp) != (V, H):
        w = jnp.pad(w, ((0, Np - V), (0, Kp - H)))

    grid = (Mp // tm, Np // tn, Kp // tk)

    flops = 2 * Mp * Np * Kp
    bytes_accessed = (Mp * Kp * x2.dtype.itemsize
                      + Np * Kp * w.dtype.itemsize
                      + Mp * Np * jnp.dtype(out_dtype).itemsize)

    out = pl.pallas_call(
        _lm_head_kernel,
        out_shape=jax.ShapeDtypeStruct((Mp, Np), out_dtype),
        grid_spec=pltpu.PrefetchScalarGridSpec(
            num_scalar_prefetch=0,
            grid=grid,
            in_specs=[
                pl.BlockSpec((tm, tk), lambda i, j, k: (i, k)),   # activations
                pl.BlockSpec((tn, tk), lambda i, j, k: (j, k)),   # weight rows
            ],
            out_specs=pl.BlockSpec((tm, tn), lambda i, j, k: (i, j)),
            scratch_shapes=[pltpu.VMEM((tm, tn), jnp.float32)],
        ),
        compiler_params=pltpu.CompilerParams(
            dimension_semantics=("parallel", "parallel", "arbitrary")),
        cost_estimate=pl.CostEstimate(
            flops=flops, transcendentals=0, bytes_accessed=bytes_accessed),
    )(x2, w)

    out = out[:M, :V]
    if bias is not None:
        # bias=False is the module default; the add is negligible vs the matmul.
        out = out + bias.astype(out.dtype)[None, :]
    return out.reshape(B, S, V)


if __name__ == "__main__":
    # Small, module-consistent shapes (batch=2, seq=8, hidden=128, vocab=1000).
    B, S = 2, 8
    hidden_size = 128
    vocab_size = 1000          # not a multiple of 128 -> exercises N padding

    key = jax.random.PRNGKey(0)
    k_x, k_w = jax.random.split(key)

    # bf16 operands (halves HBM traffic; MXU-native), f32 logits out.
    x = jax.random.normal(k_x, (B, S, hidden_size), jnp.float32).astype(jnp.bfloat16)
    wte = jax.random.normal(k_w, (vocab_size, hidden_size), jnp.float32).astype(jnp.bfloat16)

    logits = gpt2_lm_head(x, wte)              # bias=False (module default)
    logits = jax.block_until_ready(logits)

    # Reference: plain JAX x @ W.T in f32 on the same bf16-cast values.
    ref = jnp.einsum("bsh,vh->bsv",
                     x.astype(jnp.float32), wte.astype(jnp.float32))
    assert logits.shape == (B, S, vocab_size)
    assert logits.dtype == jnp.float32
    assert jnp.allclose(logits, ref, atol=1e-2, rtol=1e-2), "mismatch vs reference"

    # TODO(synk): cube_nn.Classifier tensor-parallel vocab sharding (DDP/FSDP
    # wrappers) is not modeled; this is the single-device forward projection.
    print("KERNEL_OK")
</pallas_src>

<mosaic_0001>
module attributes {stable_mosaic.version = 11 : i64} {
  func.func @_lm_head_kernel(%arg0: i32, %arg1: i32, %arg2: i32, %arg3: memref<16x128xbf16, #tpu.memory_space<vmem>>, %arg4: memref<512x128xbf16, #tpu.memory_space<vmem>>, %arg5: memref<16x512xf32, #tpu.memory_space<vmem>>, %arg6: memref<16x512xf32, #tpu.memory_space<vmem>>) attributes {dimension_semantics = [#tpu.dimension_semantics<parallel>, #tpu.dimension_semantics<parallel>, #tpu.dimension_semantics<arbitrary>], iteration_bounds = array<i64: 1, 2, 1>, scalar_prefetch = 0 : i64, scratch_operands = 1 : i64, tpu.core_type = #tpu.core_type<tc>, window_params = [{transform_indices = @transform_0, window_bounds = array<i64: 16, 128>}, {transform_indices = @transform_1, window_bounds = array<i64: 512, 128>}, {transform_indices = @transform_2, window_bounds = array<i64: 16, 512>}]} {
    %c0_i32 = arith.constant 0 : i32
    %0 = arith.cmpi eq, %arg2, %c0_i32 : i32
    %1 = arith.extui %0 : i1 to i32
    %c0_i32_0 = arith.constant 0 : i32
    %2 = arith.cmpi ne, %1, %c0_i32_0 : i32
    scf.if %2 {
      %cst_10 = arith.constant 0.000000e+00 : f32
      %12 = vector.broadcast %cst_10 : f32 to vector<16x512xf32>
      %c0_11 = arith.constant 0 : index
      %c0_12 = arith.constant 0 : index
      %13 = vector.load %arg6[%c0_11, %c0_12] : memref<16x512xf32, #tpu.memory_space<vmem>>, vector<16x512xf32>
      tpu.vector_store %arg6[%c0_11, %c0_12], %12 {strides = array<i32>} : memref<16x512xf32, #tpu.memory_space<vmem>>, vector<16x512xf32>,
    } else {
    }
    %c0 = arith.constant 0 : index
    %c0_1 = arith.constant 0 : index
    %3 = vector.load %arg6[%c0, %c0_1] : memref<16x512xf32, #tpu.memory_space<vmem>>, vector<16x512xf32>
    %c0_2 = arith.constant 0 : index
    %c0_3 = arith.constant 0 : index
    %4 = vector.load %arg3[%c0_2, %c0_3] : memref<16x128xbf16, #tpu.memory_space<vmem>>, vector<16x128xbf16>
    %c0_4 = arith.constant 0 : index
    %c0_5 = arith.constant 0 : index
    %5 = vector.load %arg4[%c0_4, %c0_5] : memref<512x128xbf16, #tpu.memory_space<vmem>>, vector<512x128xbf16>
    %cst = arith.constant dense<0.000000e+00> : vector<16x512xf32>
    %6 = tpu.matmul %4, %5, %cst {dimension_numbers = #tpu.dot_dimension_numbers<[1], [1], [0], [0], [0, 0, 1, 0], [], []>} : vector<16x128xbf16>, vector<512x128xbf16>, vector<16x512xf32> -> vector<16x512xf32>
    %7 = arith.addf %3, %6 : vector<16x512xf32>
    %c0_6 = arith.constant 0 : index
    %c0_7 = arith.constant 0 : index
    %8 = vector.load %arg6[%c0_6, %c0_7] : memref<16x512xf32, #tpu.memory_space<vmem>>, vector<16x512xf32>
    tpu.vector_store %arg6[%c0_6, %c0_7], %7 {strides = array<i32>} : memref<16x512xf32, #tpu.memory_space<vmem>>, vector<16x512xf32>,
    %c0_i32_8 = arith.constant 0 : i32
    %9 = arith.cmpi eq, %arg2, %c0_i32_8 : i32
    %10 = arith.extui %9 : i1 to i32
    %c0_i32_9 = arith.constant 0 : i32
    %11 = arith.cmpi ne, %10, %c0_i32_9 : i32
    scf.if %11 {
      %c0_10 = arith.constant 0 : index
      %c0_11 = arith.constant 0 : index
      %12 = vector.load %arg6[%c0_10, %c0_11] : memref<16x512xf32, #tpu.memory_space<vmem>>, vector<16x512xf32>
      %c0_12 = arith.constant 0 : index
      %c0_13 = arith.constant 0 : index
      %13 = vector.load %arg5[%c0_12, %c0_13] : memref<16x512xf32, #tpu.memory_space<vmem>>, vector<16x512xf32>
      tpu.vector_store %arg5[%c0_12, %c0_13], %12 {strides = array<i32>} : memref<16x512xf32, #tpu.memory_space<vmem>>, vector<16x512xf32>,
    } else {
    }
    return
  }
  func.func @transform_0(%arg0: i32, %arg1: i32, %arg2: i32) -> (i32, i32) {
    %c0_i32 = arith.constant 0 : i32
    return %arg0, %arg2 : i32, i32
  }
  func.func @transform_1(%arg0: i32, %arg1: i32, %arg2: i32) -> (i32, i32) {
    %c0_i32 = arith.constant 0 : i32
    return %arg1, %arg2 : i32, i32
  }
  func.func @transform_2(%arg0: i32, %arg1: i32, %arg2: i32) -> (i32, i32) {
    %c0_i32 = arith.constant 0 : i32
    return %arg0, %arg1 : i32, i32
  }
}

</mosaic_0001>

<llo_original>
// kernel: tpu_custom_call.1
$region0: #{tpu_custom_call.1}
  #allocation0 [shape = 'u32[]', space=smem, size = 0x4, offset = 0x4, fixed_abs, tag = 'smem constant byte address 0x4 - core index']
  #allocation1 [shape = 'u32[144,128]{1,0:T(1,128)}', space=vmem, size = 0x12000, scoped, tag = 'internal scratch']
  #allocation2 [shape = 'f32[16,512]{1,0:T(8,128)}', space=vmem, size = 0x8000, scoped, tag = 'scratch operand']
  %s0 = inlined_call_operand.hbm [shape: bf16[16,128], index: 0, kind: input, shape index: {}]
  %s1 = inlined_call_operand.hbm [shape: bf16[1024,128], index: 1, kind: input, shape index: {}]
  %s2 = inlined_call_operand.hbm [shape: f32[16,1024], index: 2, kind: output, shape index: {}]
  %s3 = sld [smem:[#allocation0]]
  $region57: #{tpu_custom_call.1} parent=0
    _
  %s5 = ssub.s32 1, %s3
  %s6 = scalar_select 0, %s5, %s3
  $region1: #{tpu_custom_call.1} parent=0
    #allocation3 [shape = 'u8[4096]{0}', space=vmem, size = 0x1000, scoped, tag = 'input window, operand 0, single buffered']
    #allocation4 [shape = 's32[2]{0}', space=sflag, size = 0x8, scoped, tag = 'scoped memory for tpu_custom_call.1']
    #allocation5 [shape = 's32[2]{0}', space=sflag, size = 0x8, scoped, tag = 'scoped memory for tpu_custom_call.1']
    #allocation6 [shape = 'u8[262144]{0}', space=vmem, size = 0x40000, scoped, tag = 'input window, operand 1']
    #allocation7 [shape = 's32[2]{0}', space=sflag, size = 0x8, scoped, tag = 'scoped memory for tpu_custom_call.1']
    #allocation8 [shape = 'u8[65536]{0}', space=vmem, size = 0x10000, scoped, tag = 'output window, operand 0']
    %7 = vsyncpa [#allocation4], 0
    %8 = vsyncpa [#allocation7], 0
    %s9 = scalar_lea.sflag [#allocation7], 1
    %10 = vsyncpa %s9, 0
    %11 = vsyncpa [#allocation5], 0
    %s12 = scalar_lea.sflag [#allocation5], 1
    %13 = vsyncpa %s12, 0
    loop: start=0, step=1, limit=4
    $region2: #{tpu_custom_call.1} parent=1 // loop_pre_header
      _
    $region3: #{tpu_custom_call.1} parent=1 // loop_header
      %s15 = sphi 0, %s19
      %p16 = scmp.ge.s32.totalorder %s15, 4
      %s22 = sphi 0, %s41
      %s23 = sphi 0, %s37
      %s24 = sphi 0, %s33
      %s25 = sphi 0, %s22
      %s26 = sphi 0, %s23
      %s27 = sphi 0, %s24
      %s28 = sphi 0, %s25
      %s29 = sphi 0, %s26
      %s30 = sphi 0, %s27
      %s46 = sphi 0, %s48
      %s49 = sphi 0, %s46
      %s50 = sphi 0, %s49
      %s66 = sphi 0, %s50
      %s74 = sphi 0, %s76
      %s77 = sphi 0, %s74
      %s78 = sphi 0, %s77
      %s94 = sphi 0, %s78
      %s102 = sphi 0, %s104
      %s105 = sphi 0, %s102
      %s106 = sphi 0, %s105
      %s122 = sphi 0, %s106
    $region4: #{tpu_custom_call.1} parent=1 // loop_header_branch
      %18 = sbr.rel (%p16) target = $region8
    $region5: #{tpu_custom_call.1} parent=1 // loop_body
      %s20 = ssub.s32 %s15, 1
      %s21 = ssub.s32 %s15, 2
      %s31 = sadd.s32 1, %s24
      %p32 = scmp.ge.s32.totalorder %s31, 1
      %s33 = scalar_select %p32, 0, %s31
      %s34 = sadd.s32 1, %s23
      %s35 = scalar_select %p32, %s34, %s23
      %p36 = scmp.ge.s32.totalorder %s35, 2
      %s37 = scalar_select %p36, 0, %s35
      %s38 = sadd.s32 1, %s22
      %s39 = scalar_select %p36, %s38, %s22
      %p40 = scmp.ge.s32.totalorder %s39, 1
      %s41 = scalar_select %p40, 0, %s39
      %s42 = ssub.s32 %s22, %s41
      %s43 = ssub.s32 %s24, %s33
      %s44 = sor.u32 %s42, %s43
      %p45 = scmp.eq.s32.totalorder %s44, 0
      %s47 = sadd.s32 %s46, 1
      %s48 = scalar_select %p45, %s46, %s47
      %p51 = pneg %p45
      %p52 = scmp.eq.s32.totalorder %s15, 1
      %p53 = por %p51, %p52
      %p54 = scmp.ne.s32.totalorder %s46, %s49
      %p55 = scmp.eq.s32.totalorder %s15, 0
      %p56 = por %p54, %p55
      %p57 = scmp.ne.s32.totalorder %s46, %s49
      %p58 = scmp.eq.s32.totalorder %s20, 1
      %p59 = por %p57, %p58
      %p60 = scmp.ne.s32.totalorder %s49, %s50
      %p61 = scmp.eq.s32.totalorder %s20, 0
      %p62 = por %p60, %p61
      %p63 = scmp.ne.s32.totalorder %s49, %s50
      %p64 = scmp.eq.s32.totalorder %s21, 1
      %p65 = por %p63, %p64
      %p67 = scmp.ne.s32.totalorder %s50, %s66
      %p68 = scmp.eq.s32.totalorder %s21, 0
      %p69 = por %p67, %p68
      %s70 = ssub.s32 %s23, %s37
      %s71 = ssub.s32 %s24, %s33
      %s72 = sor.u32 %s70, %s71
      %p73 = scmp.eq.s32.totalorder %s72, 0
      %s75 = sadd.s32 %s74, 1
      %s76 = scalar_select %p73, %s74, %s75
      %p79 = pneg %p73
      %p80 = scmp.eq.s32.totalorder %s15, 1
      %p81 = por %p79, %p80
      %p82 = scmp.ne.s32.totalorder %s74, %s77
      %p83 = scmp.eq.s32.totalorder %s15, 0
      %p84 = por %p82, %p83
      %p85 = scmp.ne.s32.totalorder %s74, %s77
      %p86 = scmp.eq.s32.totalorder %s20, 1
      %p87 = por %p85, %p86
      %p88 = scmp.ne.s32.totalorder %s77, %s78
      %p89 = scmp.eq.s32.totalorder %s20, 0
      %p90 = por %p88, %p89
      %p91 = scmp.ne.s32.totalorder %s77, %s78
      %p92 = scmp.eq.s32.totalorder %s21, 1
      %p93 = por %p91, %p92
      %p95 = scmp.ne.s32.totalorder %s78, %s94
      %p96 = scmp.eq.s32.totalorder %s21, 0
      %p97 = por %p95, %p96
      %s98 = ssub.s32 %s22, %s41
      %s99 = ssub.s32 %s23, %s37
      %s100 = sor.u32 %s98, %s99
      %p101 = scmp.eq.s32.totalorder %s100, 0
      %s103 = sadd.s32 %s102, 1
      %s104 = scalar_select %p101, %s102, %s103
      %p107 = pneg %p101
      %p108 = scmp.eq.s32.totalorder %s15, 1
      %p109 = por %p107, %p108
      %p110 = scmp.ne.s32.totalorder %s102, %s105
      %p111 = scmp.eq.s32.totalorder %s15, 0
      %p112 = por %p110, %p111
      %p113 = scmp.ne.s32.totalorder %s102, %s105
      %p114 = scmp.eq.s32.totalorder %s20, 1
      %p115 = por %p113, %p114
      %p116 = scmp.ne.s32.totalorder %s105, %s106
      %p117 = scmp.eq.s32.totalorder %s20, 0
      %p118 = por %p116, %p117
      %p119 = scmp.ne.s32.totalorder %s105, %s106
      %p120 = scmp.eq.s32.totalorder %s21, 1
      %p121 = por %p119, %p120
      %p123 = scmp.ne.s32.totalorder %s106, %s122
      %p124 = scmp.eq.s32.totalorder %s21, 0
      %p125 = por %p123, %p124
      %p126 = scmp.le.s32.totalorder 1, %s15
      %p127 = scmp.lt.s32.totalorder %s15, 3
      %p128 = pnand %p126, %p127
      %p129 = pneg %p128
      // Predicated region
      $region9: #{tpu_custom_call.1} parent=5 // pred_check
        _
      $region10: #{tpu_custom_call.1} parent=5 // pred_check_branch
        %131 = sbr.rel (%p128) target = $region12
      $region11: #{tpu_custom_call.1} parent=5 // pred_region
        %s132 = ssub.s32 %s15, 1
        // Predicated region
        $region13: #{tpu_custom_call.1} parent=11 // pred_check
          %p133 = pneg %p62
        $region14: #{tpu_custom_call.1} parent=11 // pred_check_branch
          %135 = sbr.rel (%p133) target = $region16
        $region15: #{tpu_custom_call.1} parent=11 // pred_region
          %s136 = smul.u32 2, %s25
          %s138 = ssub.s32 128, 128
          %139 = vsyncadd [#allocation4], %s138
          %s140 = sadd.s32 %s27, %s136
          %s141 = smul.addr %s140, 64
          %s142 = scalar_lea.hbm %s0, %s141
          %s143 = sshll.u32 [#allocation3], 4
          %s144 = int_to_ptr.vmem [resolvable:$true] %s143
          %149 = dma.hbm_to_vmem [thread:$0]  %s142, 128, %s144, [#allocation4], 64, 64, 4
        $region16: #{tpu_custom_call.1} parent=11 // pred_fallthru
          _
      $region12: #{tpu_custom_call.1} parent=5 // pred_fallthru
        _
      %p150 = scmp.lt.s32.totalorder %s15, 2
      // Predicated region
      $region17: #{tpu_custom_call.1} parent=5 // pred_check
        %p151 = pneg %p150
      $region18: #{tpu_custom_call.1} parent=5 // pred_check_branch
        %153 = sbr.rel (%p151) target = $region20
      $region19: #{tpu_custom_call.1} parent=5 // pred_region
        // Predicated region
        $region21: #{tpu_custom_call.1} parent=19 // pred_check
          %p154 = pneg %p84
        $region22: #{tpu_custom_call.1} parent=19 // pred_check_branch
          %156 = sbr.rel (%p154) target = $region24
        $region23: #{tpu_custom_call.1} parent=19 // pred_region
          %s157 = sand.u32 %s74, 1
          %s158 = scalar_lea.sflag [#allocation7], %s157
          %s159 = sand.u32 %s74, 1
          %s160 = smul.addr %s159, 256
          %s161 = scalar_lea.vmem [#allocation6], %s160
          %s162 = smul.u32 64, %s23
          %s164 = ssub.s32 4096, 4096
          %165 = vsyncadd %s158, %s164
          %s166 = sadd.s32 %s24, %s162
          %s167 = smul.addr %s166, 64
          %s168 = scalar_lea.hbm %s1, %s167
          %s169 = sshll.u32 %s161, 4
          %s170 = int_to_ptr.vmem [resolvable:$true] %s169
          %175 = dma.hbm_to_vmem [thread:$0]  %s168, 4096, %s170, %s158, 64, 64, 4
        $region24: #{tpu_custom_call.1} parent=19 // pred_fallthru
          _
      $region20: #{tpu_custom_call.1} parent=5 // pred_fallthru
        _
      %p176 = scmp.le.s32.totalorder 1, %s15
      %p177 = scmp.lt.s32.totalorder %s15, 3
      %p178 = pnand %p176, %p177
      %p179 = pneg %p178
      // Predicated region
      $region25: #{tpu_custom_call.1} parent=5 // pred_check
        _
      $region26: #{tpu_custom_call.1} parent=5 // pred_check_branch
        %181 = sbr.rel (%p178) target = $region28
      $region27: #{tpu_custom_call.1} parent=5 // pred_region
        %s182 = ssub.s32 %s15, 1
        // Predicated region
        $region29: #{tpu_custom_call.1} parent=27 // pred_check
          %p183 = pneg %p62
        $region30: #{tpu_custom_call.1} parent=27 // pred_check_branch
          %185 = sbr.rel (%p183) target = $region32
        $region31: #{tpu_custom_call.1} parent=27 // pred_region
          %186 = dma.done [#allocation4], 128
        $region32: #{tpu_custom_call.1} parent=27 // pred_fallthru
          _
        %s187 = sand.u32 %s77, 1
        %s188 = scalar_lea.sflag [#allocation7], %s187
        %s189 = sand.u32 %s77, 1
        %s190 = smul.addr %s189, 256
        %s191 = scalar_lea.vmem [#allocation6], %s190
        // Predicated region
        $region33: #{tpu_custom_call.1} parent=27 // pred_check
          %p192 = pneg %p90
        $region34: #{tpu_custom_call.1} parent=27 // pred_check_branch
          %194 = sbr.rel (%p192) target = $region36
        $region35: #{tpu_custom_call.1} parent=27 // pred_region
          %195 = dma.done %s188, 4096
        $region36: #{tpu_custom_call.1} parent=27 // pred_fallthru
          _
        %p196 = pneg %p62
        %p197 = pneg %p59
        %s198 = sand.u32 %s77, 1
        %s199 = scalar_lea.sflag [#allocation7], %s198
        %s200 = sand.u32 %s77, 1
        %s201 = smul.addr %s200, 256
        %s202 = scalar_lea.vmem [#allocation6], %s201
        %p203 = pneg %p90
        %p204 = pneg %p87
        %p205 = pneg %p118
        %p206 = pneg %p115
        %s207 = sand.u32 %s105, 1
        %s208 = scalar_lea.sflag [#allocation5], %s207
        %s209 = sand.u32 %s105, 1
        %s210 = smul.addr %s209, 64
        %s211 = scalar_lea.vmem [#allocation8], %s210
        %s212 = smul.u32 2, %s25
        %s213 = smul.u32 64, %s26
        %s214 = smul.u32 2, %s25
        %s215 = smul.u32 4, %s26
        %p217 = scmp.eq.s32.totalorder %s27, 0
        // Predicated region
        $region37: #{tpu_custom_call.1} parent=27 // pred_check
          %p218 = pneg %p217
        $region38: #{tpu_custom_call.1} parent=27 // pred_check_branch
          %220 = sbr.rel (%p218) target = $region40
        $region39: #{tpu_custom_call.1} parent=27 // pred_region
          %221 = vst [vmem:[#allocation2] sm:$0xff] 0.0
          %222 = vst [vmem:[#allocation2 + $0x8] sm:$0xff] 0.0
          %223 = vst [vmem:[#allocation2 + $0x10] sm:$0xff] 0.0
          %224 = vst [vmem:[#allocation2 + $0x18] sm:$0xff] 0.0
          %225 = vst [vmem:[#allocation2 + $0x20] sm:$0xff] 0.0
          %226 = vst [vmem:[#allocation2 + $0x28] sm:$0xff] 0.0
          %227 = vst [vmem:[#allocation2 + $0x30] sm:$0xff] 0.0
          %228 = vst [vmem:[#allocation2 + $0x38] sm:$0xff] 0.0
        $region40: #{tpu_custom_call.1} parent=27 // pred_fallthru
          _
        %v229 = vld [vmem:[#allocation2] sm:$0xff]
        %v230 = vld [vmem:[#allocation2 + $0x8] sm:$0xff]
        %v231 = vld [vmem:[#allocation2 + $0x10] sm:$0xff]
        %v232 = vld [vmem:[#allocation2 + $0x18] sm:$0xff]
        %v233 = vld [vmem:[#allocation2 + $0x20] sm:$0xff]
        %v234 = vld [vmem:[#allocation2 + $0x28] sm:$0xff]
        %v235 = vld [vmem:[#allocation2 + $0x30] sm:$0xff]
        %v236 = vld [vmem:[#allocation2 + $0x38] sm:$0xff]
        %v237 = vld [vmem:[#allocation3] sm:$0xf]
        %v238 = vld [vmem:[#allocation3 + $0x4] sm:$0xf]
        %v239 = vld [vmem:[%s191] sm:$0xf]
        %v240 = vld [vmem:[%s191 + $0x4] sm:$0xf]
        %v241 = vld [vmem:[%s191 + $0x8] sm:$0xf]
        %v242 = vld [vmem:[%s191 + $0xc] sm:$0xf]
        %v243 = vld [vmem:[%s191 + $0x10] sm:$0xf]
        %v244 = vld [vmem:[%s191 + $0x14] sm:$0xf]
        %v245 = vld [vmem:[%s191 + $0x18] sm:$0xf]
        %v246 = vld [vmem:[%s191 + $0x1c] sm:$0xf]
        %v247 = vld [vmem:[%s191 + $0x20] sm:$0xf]
        %v248 = vld [vmem:[%s191 + $0x24] sm:$0xf]
        %v249 = vld [vmem:[%s191 + $0x28] sm:$0xf]
        %v250 = vld [vmem:[%s191 + $0x2c] sm:$0xf]
        %v251 = vld [vmem:[%s191 + $0x30] sm:$0xf]
        %v252 = vld [vmem:[%s191 + $0x34] sm:$0xf]
        %v253 = vld [vmem:[%s191 + $0x38] sm:$0xf]
        %v254 = vld [vmem:[%s191 + $0x3c] sm:$0xf]
        %v255 = vld [vmem:[%s191 + $0x40] sm:$0xf]
        %v256 = vld [vmem:[%s191 + $0x44] sm:$0xf]
        %v257 = vld [vmem:[%s191 + $0x48] sm:$0xf]
        %v258 = vld [vmem:[%s191 + $0x4c] sm:$0xf]
        %v259 = vld [vmem:[%s191 + $0x50] sm:$0xf]
        %v260 = vld [vmem:[%s191 + $0x54] sm:$0xf]
        %v261 = vld [vmem:[%s191 + $0x58] sm:$0xf]
        %v262 = vld [vmem:[%s191 + $0x5c] sm:$0xf]
        %v263 = vld [vmem:[%s191 + $0x60] sm:$0xf]
        %v264 = vld [vmem:[%s191 + $0x64] sm:$0xf]
        %v265 = vld [vmem:[%s191 + $0x68] sm:$0xf]
        %v266 = vld [vmem:[%s191 + $0x6c] sm:$0xf]
        %v267 = vld [vmem:[%s191 + $0x70] sm:$0xf]
        %v268 = vld [vmem:[%s191 + $0x74] sm:$0xf]
        %v269 = vld [vmem:[%s191 + $0x78] sm:$0xf]
        %v270 = vld [vmem:[%s191 + $0x7c] sm:$0xf]
        %v271 = vld [vmem:[%s191 + $0x80] sm:$0xf]
        %v272 = vld [vmem:[%s191 + $0x84] sm:$0xf]
        %v273 = vld [vmem:[%s191 + $0x88] sm:$0xf]
        %v274 = vld [vmem:[%s191 + $0x8c] sm:$0xf]
        %v275 = vld [vmem:[%s191 + $0x90] sm:$0xf]
        %v276 = vld [vmem:[%s191 + $0x94] sm:$0xf]
        %v277 = vld [vmem:[%s191 + $0x98] sm:$0xf]
        %v278 = vld [vmem:[%s191 + $0x9c] sm:$0xf]
        %v279 = vld [vmem:[%s191 + $0xa0] sm:$0xf]
        %v280 = vld [vmem:[%s191 + $0xa4] sm:$0xf]
        %v281 = vld [vmem:[%s191 + $0xa8] sm:$0xf]
        %v282 = vld [vmem:[%s191 + $0xac] sm:$0xf]
        %v283 = vld [vmem:[%s191 + $0xb0] sm:$0xf]
        %v284 = vld [vmem:[%s191 + $0xb4] sm:$0xf]
        %v285 = vld [vmem:[%s191 + $0xb8] sm:$0xf]
        %v286 = vld [vmem:[%s191 + $0xbc] sm:$0xf]
        %v287 = vld [vmem:[%s191 + $0xc0] sm:$0xf]
        %v288 = vld [vmem:[%s191 + $0xc4] sm:$0xf]
        %v289 = vld [vmem:[%s191 + $0xc8] sm:$0xf]
        %v290 = vld [vmem:[%s191 + $0xcc] sm:$0xf]
        %v291 = vld [vmem:[%s191 + $0xd0] sm:$0xf]
        %v292 = vld [vmem:[%s191 + $0xd4] sm:$0xf]
        %v293 = vld [vmem:[%s191 + $0xd8] sm:$0xf]
        %v294 = vld [vmem:[%s191 + $0xdc] sm:$0xf]
        %v295 = vld [vmem:[%s191 + $0xe0] sm:$0xf]
        %v296 = vld [vmem:[%s191 + $0xe4] sm:$0xf]
        %v297 = vld [vmem:[%s191 + $0xe8] sm:$0xf]
        %v298 = vld [vmem:[%s191 + $0xec] sm:$0xf]
        %v299 = vld [vmem:[%s191 + $0xf0] sm:$0xf]
        %v300 = vld [vmem:[%s191 + $0xf4] sm:$0xf]
        %v301 = vld [vmem:[%s191 + $0xf8] sm:$0xf]
        %v302 = vld [vmem:[%s191 + $0xfc] sm:$0xf]
        %v305 = vunpack.c.l.b16 %v237
        %v306 = vunpack.c.l.b16 %v238
        %v307 = vpack.c.b16 %v306, %v305
        %v373 = vunpack.c.l.b16 %v239
        %v374 = vunpack.c.l.b16 %v240
        %v375 = vunpack.c.l.b16 %v241
        %v376 = vunpack.c.l.b16 %v242
        %v377 = vunpack.c.l.b16 %v243
        %v378 = vunpack.c.l.b16 %v244
        %v379 = vunpack.c.l.b16 %v245
        %v380 = vunpack.c.l.b16 %v246
        %v381 = vunpack.c.l.b16 %v247
        %v382 = vunpack.c.l.b16 %v248
        %v383 = vunpack.c.l.b16 %v249
        %v384 = vunpack.c.l.b16 %v250
        %v385 = vunpack.c.l.b16 %v251
        %v386 = vunpack.c.l.b16 %v252
        %v387 = vunpack.c.l.b16 %v253
        %v388 = vunpack.c.l.b16 %v254
        %v389 = vunpack.c.l.b16 %v255
        %v390 = vunpack.c.l.b16 %v256
        %v391 = vunpack.c.l.b16 %v257
        %v392 = vunpack.c.l.b16 %v258
        %v393 = vunpack.c.l.b16 %v259
        %v394 = vunpack.c.l.b16 %v260
        %v395 = vunpack.c.l.b16 %v261
        %v396 = vunpack.c.l.b16 %v262
        %v397 = vunpack.c.l.b16 %v263
        %v398 = vunpack.c.l.b16 %v264
        %v399 = vunpack.c.l.b16 %v265
        %v400 = vunpack.c.l.b16 %v266
        %v401 = vunpack.c.l.b16 %v267
        %v402 = vunpack.c.l.b16 %v268
        %v403 = vunpack.c.l.b16 %v269
        %v404 = vunpack.c.l.b16 %v270
        %v405 = vunpack.c.l.b16 %v271
        %v406 = vunpack.c.l.b16 %v272
        %v407 = vunpack.c.l.b16 %v273
        %v408 = vunpack.c.l.b16 %v274
        %v409 = vunpack.c.l.b16 %v275
        %v410 = vunpack.c.l.b16 %v276
        %v411 = vunpack.c.l.b16 %v277
        %v412 = vunpack.c.l.b16 %v278
        %v413 = vunpack.c.l.b16 %v279
        %v414 = vunpack.c.l.b16 %v280
        %v415 = vunpack.c.l.b16 %v281
        %v416 = vunpack.c.l.b16 %v282
        %v417 = vunpack.c.l.b16 %v283
        %v418 = vunpack.c.l.b16 %v284
        %v419 = vunpack.c.l.b16 %v285
        %v420 = vunpack.c.l.b16 %v286
        %v421 = vunpack.c.l.b16 %v287
        %v422 = vunpack.c.l.b16 %v288
        %v423 = vunpack.c.l.b16 %v289
        %v424 = vunpack.c.l.b16 %v290
        %v425 = vunpack.c.l.b16 %v291
        %v426 = vunpack.c.l.b16 %v292
        %v427 = vunpack.c.l.b16 %v293
        %v428 = vunpack.c.l.b16 %v294
        %v429 = vunpack.c.l.b16 %v295
        %v430 = vunpack.c.l.b16 %v296
        %v431 = vunpack.c.l.b16 %v297
        %v432 = vunpack.c.l.b16 %v298
        %v433 = vunpack.c.l.b16 %v299
        %v434 = vunpack.c.l.b16 %v300
        %v435 = vunpack.c.l.b16 %v301
        %v436 = vunpack.c.l.b16 %v302
        %v437 = vpack.c.b16 %v374, %v373
        %v438 = vpack.c.b16 %v376, %v375
        %v439 = vpack.c.b16 %v378, %v377
        %v440 = vpack.c.b16 %v380, %v379
        %v441 = vpack.c.b16 %v382, %v381
        %v442 = vpack.c.b16 %v384, %v383
        %v443 = vpack.c.b16 %v386, %v385
        %v444 = vpack.c.b16 %v388, %v387
        %v445 = vpack.c.b16 %v390, %v389
        %v446 = vpack.c.b16 %v392, %v391
        %v447 = vpack.c.b16 %v394, %v393
        %v448 = vpack.c.b16 %v396, %v395
        %v449 = vpack.c.b16 %v398, %v397
        %v450 = vpack.c.b16 %v400, %v399
        %v451 = vpack.c.b16 %v402, %v401
        %v452 = vpack.c.b16 %v404, %v403
        %v453 = vpack.c.b16 %v406, %v405
        %v454 = vpack.c.b16 %v408, %v407
        %v455 = vpack.c.b16 %v410, %v409
        %v456 = vpack.c.b16 %v412, %v411
        %v457 = vpack.c.b16 %v414, %v413
        %v458 = vpack.c.b16 %v416, %v415
        %v459 = vpack.c.b16 %v418, %v417
        %v460 = vpack.c.b16 %v420, %v419
        %v461 = vpack.c.b16 %v422, %v421
        %v462 = vpack.c.b16 %v424, %v423
        %v463 = vpack.c.b16 %v426, %v425
        %v464 = vpack.c.b16 %v428, %v427
        %v465 = vpack.c.b16 %v430, %v429
        %v466 = vpack.c.b16 %v432, %v431
        %v467 = vpack.c.b16 %v434, %v433
        %v468 = vpack.c.b16 %v436, %v435
        %501 = vmatprep.subr.bf16.mxu0 0
        %502 = vmatpush1.bf16.xpose.msra.mxu0 %v437
        %503 = vmatprep.subr.bf16.mxu0 0
        %504 = vmatpush1.bf16.xpose.msra.mxu0 %v438
        %505 = vmatprep.subr.bf16.mxu0 0
        %506 = vmatpush1.bf16.xpose.msra.mxu0 %v439
        %507 = vmatprep.subr.bf16.mxu0 0
        %508 = vmatpush1.bf16.xpose.msra.mxu0 %v440
        %509 = vmatprep.subr.bf16.mxu0 0
        %510 = vmatpush1.bf16.xpose.msra.mxu0 %v441
        %511 = vmatprep.subr.bf16.mxu0 0
        %512 = vmatpush1.bf16.xpose.msra.mxu0 %v442
        %513 = vmatprep.subr.bf16.mxu0 0
        %514 = vmatpush1.bf16.xpose.msra.mxu0 %v443
        %515 = vmatprep.subr.bf16.mxu0 0
        %516 = vmatpush1.bf16.xpose.msra.mxu0 %v444
        %517 = vmatprep.subr.bf16.mxu0 0
        %518 = vmatpush1.bf16.xpose.msra.mxu0 %v445
        %519 = vmatprep.subr.bf16.mxu0 0
        %520 = vmatpush1.bf16.xpose.msra.mxu0 %v446
        %521 = vmatprep.subr.bf16.mxu0 0
        %522 = vmatpush1.bf16.xpose.msra.mxu0 %v447
        %523 = vmatprep.subr.bf16.mxu0 0
        %524 = vmatpush1.bf16.xpose.msra.mxu0 %v448
        %525 = vmatprep.subr.bf16.mxu0 0
        %526 = vmatpush1.bf16.xpose.msra.mxu0 %v449
        %527 = vmatprep.subr.bf16.mxu0 0
        %528 = vmatpush1.bf16.xpose.msra.mxu0 %v450
        %529 = vmatprep.subr.bf16.mxu0 0
        %530 = vmatpush1.bf16.xpose.msra.mxu0 %v451
        %531 = vmatprep.subr.bf16.mxu0 0
        %532 = vmatpush1.bf16.xpose.msra.mxu0 %v452
        %533 = vmatprep.mubr.bf16.mxu0 0
        %534 = vmatmul.mubr.bf16.gmra.mrb[0].mxu0 %v307
        %v535 = vpop.f32.mrb[0].mxu0
        %v536 = vadd.f32 0.0, %v535
        %v537 = vpop.f32.mrb[0].mxu0
        %v538 = vadd.f32 0.0, %v537
        %v539 = vpop.f32.mrb[0].mxu0
        %v540 = vadd.f32 0.0, %v539
        %v541 = vpop.f32.mrb[0].mxu0
        %v542 = vadd.f32 0.0, %v541
        %543 = vdwg.mxu0
        %544 = vmatprep.subr.bf16.mxu0 0
        %545 = vmatpush1.bf16.xpose.msra.mxu0 %v453
        %546 = vmatprep.subr.bf16.mxu0 0
        %547 = vmatpush1.bf16.xpose.msra.mxu0 %v454
        %548 = vmatprep.subr.bf16.mxu0 0
        %549 = vmatpush1.bf16.xpose.msra.mxu0 %v455
        %550 = vmatprep.subr.bf16.mxu0 0
        %551 = vmatpush1.bf16.xpose.msra.mxu0 %v456
        %552 = vmatprep.subr.bf16.mxu0 0
        %553 = vmatpush1.bf16.xpose.msra.mxu0 %v457
        %554 = vmatprep.subr.bf16.mxu0 0
        %555 = vmatpush1.bf16.xpose.msra.mxu0 %v458
        %556 = vmatprep.subr.bf16.mxu0 0
        %557 = vmatpush1.bf16.xpose.msra.mxu0 %v459
        %558 = vmatprep.subr.bf16.mxu0 0
        %559 = vmatpush1.bf16.xpose.msra.mxu0 %v460
        %560 = vmatprep.subr.bf16.mxu0 0
        %561 = vmatpush1.bf16.xpose.msra.mxu0 %v461
        %562 = vmatprep.subr.bf16.mxu0 0
        %563 = vmatpush1.bf16.xpose.msra.mxu0 %v462
        %564 = vmatprep.subr.bf16.mxu0 0
        %565 = vmatpush1.bf16.xpose.msra.mxu0 %v463
        %566 = vmatprep.subr.bf16.mxu0 0
        %567 = vmatpush1.bf16.xpose.msra.mxu0 %v464
        %568 = vmatprep.subr.bf16.mxu0 0
        %569 = vmatpush1.bf16.xpose.msra.mxu0 %v465
        %570 = vmatprep.subr.bf16.mxu0 0
        %571 = vmatpush1.bf16.xpose.msra.mxu0 %v466
        %572 = vmatprep.subr.bf16.mxu0 0
        %573 = vmatpush1.bf16.xpose.msra.mxu0 %v467
        %574 = vmatprep.subr.bf16.mxu0 0
        %575 = vmatpush1.bf16.xpose.msra.mxu0 %v468
        %576 = vmatprep.mubr.bf16.mxu0 0
        %577 = vmatmul.mubr.bf16.gmra.mrb[0].mxu0 %v307
        %v578 = vpop.f32.mrb[0].mxu0
        %v579 = vadd.f32 0.0, %v578
        %v580 = vpop.f32.mrb[0].mxu0
        %v581 = vadd.f32 0.0, %v580
        %v582 = vpop.f32.mrb[0].mxu0
        %v583 = vadd.f32 0.0, %v582
        %v584 = vpop.f32.mrb[0].mxu0
        %v585 = vadd.f32 0.0, %v584
        %586 = vdwg.mxu0
        %v587 = vadd.f32 %v229, %v536
        %v588 = vadd.f32 %v230, %v538
        %v589 = vadd.f32 %v231, %v579
        %v590 = vadd.f32 %v232, %v581
        %v591 = vadd.f32 %v233, %v540
        %v592 = vadd.f32 %v234, %v542
        %v593 = vadd.f32 %v235, %v583
        %v594 = vadd.f32 %v236, %v585
        %595 = vst [vmem:[#allocation2] sm:$0xff] %v587
        %596 = vst [vmem:[#allocation2 + $0x8] sm:$0xff] %v588
        %597 = vst [vmem:[#allocation2 + $0x10] sm:$0xff] %v589
        %598 = vst [vmem:[#allocation2 + $0x18] sm:$0xff] %v590
        %599 = vst [vmem:[#allocation2 + $0x20] sm:$0xff] %v591
        %600 = vst [vmem:[#allocation2 + $0x28] sm:$0xff] %v592
        %601 = vst [vmem:[#allocation2 + $0x30] sm:$0xff] %v593
        %602 = vst [vmem:[#allocation2 + $0x38] sm:$0xff] %v594
        // Predicated region
        $region41: #{tpu_custom_call.1} parent=27 // pred_check
          %p603 = pneg %p217
        $region42: #{tpu_custom_call.1} parent=27 // pred_check_branch
          %605 = sbr.rel (%p603) target = $region44
        $region43: #{tpu_custom_call.1} parent=27 // pred_region
          %v606 = vld [vmem:[#allocation2] sm:$0xff]
          %v607 = vld [vmem:[#allocation2 + $0x8] sm:$0xff]
          %v608 = vld [vmem:[#allocation2 + $0x10] sm:$0xff]
          %v609 = vld [vmem:[#allocation2 + $0x18] sm:$0xff]
          %v610 = vld [vmem:[#allocation2 + $0x20] sm:$0xff]
          %v611 = vld [vmem:[#allocation2 + $0x28] sm:$0xff]
          %v612 = vld [vmem:[#allocation2 + $0x30] sm:$0xff]
          %v613 = vld [vmem:[#allocation2 + $0x38] sm:$0xff]
          %614 = vst [vmem:[%s211] sm:$0xff] %v606
          %615 = vst [vmem:[%s211 + $0x8] sm:$0xff] %v607
          %616 = vst [vmem:[%s211 + $0x10] sm:$0xff] %v608
          %617 = vst [vmem:[%s211 + $0x18] sm:$0xff] %v609
          %618 = vst [vmem:[%s211 + $0x20] sm:$0xff] %v610
          %619 = vst [vmem:[%s211 + $0x28] sm:$0xff] %v611
          %620 = vst [vmem:[%s211 + $0x30] sm:$0xff] %v612
          %621 = vst [vmem:[%s211 + $0x38] sm:$0xff] %v613
        $region44: #{tpu_custom_call.1} parent=27 // pred_fallthru
          _
        %s622 = sand.u32 %s105, 1
        %s623 = scalar_lea.sflag [#allocation5], %s622
        %s624 = sand.u32 %s105, 1
        %s625 = smul.addr %s624, 64
        %s626 = scalar_lea.vmem [#allocation8], %s625
        // Predicated region
        $region45: #{tpu_custom_call.1} parent=27 // pred_check
          %p627 = pneg %p115
        $region46: #{tpu_custom_call.1} parent=27 // pred_check_branch
          %629 = sbr.rel (%p627) target = $region48
        $region47: #{tpu_custom_call.1} parent=27 // pred_region
          %s630 = smul.u32 2, %s25
          %s631 = smul.u32 4, %s26
          %s633 = ssub.s32 1024, 1024
          %634 = vsyncadd %s623, %s633
          %s635 = smul.addr %s630, 8
          %s636 = sadd.s32 %s631, %s635
          %s637 = smul.addr %s636, 128
          %s638 = scalar_lea.hbm %s2, %s637
          %s639 = sshll.u32 %s626, 4
          %s640 = int_to_ptr.vmem [resolvable:$true] %s639
          %645 = dma.vmem_to_hbm [thread:$0]  %s640, 1024, %s638, %s623, 512, 1024, 32
        $region48: #{tpu_custom_call.1} parent=27 // pred_fallthru
          _
      $region28: #{tpu_custom_call.1} parent=5 // pred_fallthru
        _
      %p646 = scmp.le.s32.totalorder 2, %s15
      // Predicated region
      $region49: #{tpu_custom_call.1} parent=5 // pred_check
        %p647 = pneg %p646
      $region50: #{tpu_custom_call.1} parent=5 // pred_check_branch
        %649 = sbr.rel (%p647) target = $region52
      $region51: #{tpu_custom_call.1} parent=5 // pred_region
        %s650 = ssub.s32 %s15, 2
        // Predicated region
        $region53: #{tpu_custom_call.1} parent=51 // pred_check
          %p651 = pneg %p121
        $region54: #{tpu_custom_call.1} parent=51 // pred_check_branch
          %653 = sbr.rel (%p651) target = $region56
        $region55: #{tpu_custom_call.1} parent=51 // pred_region
          %s654 = sand.u32 %s106, 1
          %s655 = scalar_lea.sflag [#allocation5], %s654
          %s656 = sand.u32 %s106, 1
          %s657 = smul.addr %s656, 64
          %s658 = scalar_lea.vmem [#allocation8], %s657
          %659 = dma.done %s655, 1024
        $region56: #{tpu_custom_call.1} parent=51 // pred_fallthru
          _
      $region52: #{tpu_custom_call.1} parent=5 // pred_fallthru
        _
    $region6: #{tpu_custom_call.1} parent=1 // loop_footer
      %s19 = sadd.s32 1, %s15
    $region7: #{tpu_custom_call.1} parent=1 // loop_footer_branch
      %14 = sbr.rel target = $region3
    $region8: #{tpu_custom_call.1} parent=1 // loop_exit
      _
    %660 = vsyncpa [#allocation4], 1
    %s661 = scalar_lea.sflag [#allocation4], 1
    %662 = vsyncpa %s661, 1
    %663 = vsyncpa [#allocation7], 1
    %s664 = scalar_lea.sflag [#allocation7], 1
    %665 = vsyncpa %s664, 1
    %666 = vsyncpa [#allocation5], 1
    %s667 = scalar_lea.sflag [#allocation5], 1
    %668 = vsyncpa %s667, 1

</llo_original>
